<compile_context>
chip_gen: v6e
topology: v6e:2x2x1
jax: 0.10.0
libtpu: 0.0.40
codegen_flags: <defaults>
</compile_context>

<pallas_src>
import numpy as np
import jax
import jax.numpy as jnp
from jax import lax
from jax.experimental import pallas as pl
from jax.experimental.pallas import tpu as pltpu


# --------------------------------------------------------------------------- #
# Shape / hardware heuristics
# --------------------------------------------------------------------------- #
def _tpu_vmem_capacity_bytes():
    try:
        return int(pltpu.get_tpu_info().vmem_capacity_bytes)
    except Exception:
        return 64 << 20  # conservative (v7x-sized) fallback


def _pick_fold(h, w):
    """Lane-dense fold factor G: (H, W) is reshaped (for free, row-major) to
    (H/G, G*W) so the last dim is a multiple of 128 lanes when possible."""
    if w % 128 == 0:
        return 1
    for g in range(1, h + 1):                      # smallest G giving 128-multiple lanes
        if h % g == 0 and (g * w) % 128 == 0 and g * w <= 8192:
            return g
    for g in range(h, 0, -1):                      # fallback: just densify a bit
        if h % g == 0 and g * w <= 512:
            return g
    return 1


def _pick_tile_h(h_f, wf, x_itemsize, big_vmem):
    """Rows per (folded) H tile: big on v5e/v6e, conservative on v7x, aligned
    to 32 rows (keeps bf16/int8 inputs and the uint8 mask on native tiles)."""
    target = (4 << 20) if big_vmem else (3 << 20) // 2   # per x input buffer
    per_row = wf * (x_itemsize + 1)                      # x row + uint8 keep row
    th = max(1, target // per_row)
    if th >= h_f:
        return h_f                                       # single tile per image
    align = 32 if h_f >= 32 else 8
    th = max(align, (th // align) * align)
    return int(min(th, h_f))


# --------------------------------------------------------------------------- #
# Kernel
# --------------------------------------------------------------------------- #
def _make_tv_kernel(*, w_orig, fold, th, wf, acc_rows, h_f, mask_resident, ragged):
    """Builds the per-tile kernel. Static config is closed over.

    Refs:
      x_ref:     (th, wf)        folded image tile, native dtype
      keep_ref:  (h_f, wf) uint8 if mask_resident else (th, wf) uint8 tile
      o_ref:     (acc_rows, wf)  f32 per-image accumulator (VMEM-resident over h)
      carry_ref: (1, wf)         f32 halo: last folded row of the previous tile
    """
    groups = th // acc_rows

    def kernel(x_ref, keep_ref, o_ref, carry_ref):
        hi = pl.program_id(1)
        xt = x_ref[...].astype(jnp.float32)

        # First H tile of every image: reset accumulator and halo (zero pad
        # above the image top).
        @pl.when(hi == 0)
        def _():
            o_ref[...] = jnp.zeros_like(o_ref)
            carry_ref[...] = jnp.zeros_like(carry_ref)

        rows = lax.broadcasted_iota(jnp.int32, (th, wf), 0)
        cols = lax.broadcasted_iota(jnp.int32, (th, wf), 1)

        # Previous folded row (halo for row 0, sublane roll otherwise).
        prev_row = carry_ref[...]
        if th == 1:
            xprev = prev_row
        else:
            xprev = jnp.where(rows == 0, prev_row, pltpu.roll(xt, 1, 0))

        # Top neighbour. With folding, original row y = (folded_row)*G + f
        # lives in lane segment f; its top neighbour is segment f-1 of the same
        # folded row (lane roll by W), except segment 0 which comes from the
        # previous folded row's last segment (wrap of the same lane roll).
        if fold == 1:
            top = xprev
        else:
            top = jnp.where(cols < w_orig,
                            pltpu.roll(xprev, w_orig, 1),
                            pltpu.roll(xt, w_orig, 1))

        # Left neighbour: lane roll by 1; column 0 of every segment is the
        # zero padding (and also stops leakage across folded segments).
        left_edge = (cols == 0) if fold == 1 else ((cols % w_orig) == 0)
        left = jnp.where(left_edge, 0.0, pltpu.roll(xt, 1, 1))

        var = jnp.abs(top + left - 2.0 * xt)

        # Mask gate (uint8 keep precomputed in the wrapper).
        if mask_resident:
            row0 = hi * th
            if th % 8 == 0:
                row0 = pl.multiple_of(row0, 8)
            keep = keep_ref[pl.ds(row0, th), :] != 0
        else:
            keep = keep_ref[...] != 0

        gate = keep
        if ragged:
            # Last H tile may overhang the image; drop the padded rows.
            gate = jnp.logical_and(gate, rows < (h_f - hi * th))

        contrib = jnp.where(gate, var, 0.0)

        # Sublane-group reduction (VALU adds only) into the small accumulator.
        red = contrib[0:acc_rows, :]
        for g in range(1, groups):
            red = red + contrib[g * acc_rows:(g + 1) * acc_rows, :]
        o_ref[...] += red

        # Halo for the next H tile of this image (reset at hi == 0 above).
        carry_ref[...] = xt[th - 1:th, :]

    return kernel


# --------------------------------------------------------------------------- #
# Wrapper
# --------------------------------------------------------------------------- #
def _tv_mean_one(x, keep2d, tile_h=None, fold=None, mask_resident=None):
    """mean over (N, C, H, W) of |TV(x)| * keep, as one pallas_call."""
    n, c, h, w = x.shape
    b = n * c
    g = int(fold) if fold is not None else _pick_fold(h, w)
    assert h % g == 0, "fold factor must divide H"
    h_f, wf = h // g, g * w

    xf = x.reshape(b, h_f, wf)          # free reshape (row-major contiguous)
    keepf = keep2d.reshape(h_f, wf)     # free reshape

    big_vmem = _tpu_vmem_capacity_bytes() >= (96 << 20)
    if tile_h is None:
        th = _pick_tile_h(h_f, wf, x.dtype.itemsize, big_vmem)
    else:
        th = int(tile_h)
        assert 1 <= th <= h_f and (th % 8 == 0 or th == h_f)

    grid_h = pl.cdiv(h_f, th)
    ragged = (h_f % th) != 0
    acc_rows = 8 if th % 8 == 0 else th

    # Mask placement: small masks stay VMEM-resident (read from HBM once);
    # large masks are streamed per tile (uint8 -> only B*H*W bytes of traffic,
    # no big resident buffer on v7x / v5e).
    if th == h_f:
        resident = False                # one tile == the whole mask anyway
    elif mask_resident is None:
        resident = (h_f * wf) <= (2 << 20) or (th % 32 != 0)
    else:
        resident = bool(mask_resident)

    if resident:
        keep_spec = pl.BlockSpec((h_f, wf), lambda bi, hi: (0, 0))
        keep_vmem = h_f * wf
    else:
        keep_spec = pl.BlockSpec((th, wf), lambda bi, hi: (hi, 0))
        keep_vmem = th * wf

    # Explicit VMEM budget: x + keep double-buffered, resident accumulator,
    # halo, plus headroom; clamped per generation.
    need = (2 * th * wf * x.dtype.itemsize + 2 * keep_vmem
            + 2 * acc_rows * wf * 4 + wf * 4)
    vmem_limit = int(min(max(need + (8 << 20), 32 << 20),
                         (96 << 20) if big_vmem else (48 << 20)))

    kernel = _make_tv_kernel(w_orig=w, fold=g, th=th, wf=wf, acc_rows=acc_rows,
                             h_f=h_f, mask_resident=resident, ragged=ragged)

    partial = pl.pallas_call(
        kernel,
        out_shape=jax.ShapeDtypeStruct((b, acc_rows, wf), jnp.float32),
        grid=(b, grid_h),
        in_specs=[
            pl.BlockSpec((None, th, wf), lambda bi, hi: (bi, hi, 0)),
            keep_spec,
        ],
        out_specs=pl.BlockSpec((None, acc_rows, wf), lambda bi, hi: (bi, 0, 0)),
        scratch_shapes=[pltpu.VMEM((1, wf), jnp.float32)],  # halo carry
        compiler_params=pltpu.CompilerParams(
            dimension_semantics=("parallel", "arbitrary"),
            vmem_limit_bytes=vmem_limit),
    )(xf, keepf)

    return jnp.sum(partial) / jnp.float32(b * h * w)


def total_variation_loss(results, mask, *, tile_h=None, fold=None, mask_resident=None):
    """Average over results of mean(|TV-conv(res)| * (mask <= 127))."""
    mask = jnp.asarray(mask)
    keep2d = (mask <= 127).astype(jnp.uint8)
    loss = None
    for r in results:
        x = jnp.asarray(r)
        assert x.ndim == 4 and tuple(x.shape[2:]) == tuple(mask.shape), \
            "mask must match each result's spatial size"
        m = _tv_mean_one(x, keep2d, tile_h, fold, mask_resident)
        loss = m if loss is None else loss + m
    return loss / len(results)


# --------------------------------------------------------------------------- #
# Pure-JAX reference and self-test
# --------------------------------------------------------------------------- #
def _reference_loss(results, mask):
    keep = (jnp.asarray(mask) <= 127).astype(jnp.float32)
    total = 0.0
    for r in results:
        x = jnp.asarray(r).astype(jnp.float32)
        top = jnp.pad(x, ((0, 0), (0, 0), (1, 0), (0, 0)))[:, :, :-1, :]
        left = jnp.pad(x, ((0, 0), (0, 0), (0, 0), (1, 0)))[:, :, :, :-1]
        var = top + left - 2.0 * x
        total = total + jnp.mean(jnp.abs(var) * keep[None, None])
    return total / len(results)


if __name__ == "__main__":
    key = jax.random.PRNGKey(0)
    ks = jax.random.split(key, 6)

    def _check(results, mask, **kw):
        got = jax.block_until_ready(total_variation_loss(results, mask, **kw))
        ref = jax.block_until_ready(_reference_loss(results, mask))
        assert np.allclose(np.asarray(got), np.asarray(ref),
                           rtol=1e-5, atol=1e-6), (kw, np.asarray(got), np.asarray(ref))

    # 1) Module-typical small case: 2 results, (N=2, C=3, 16x16), f32.
    #    W=16 -> lane fold G=8 -> folded (2, 128) images, single H tile.
    N, C, H, W = 2, 3, 16, 16
    res_f32 = [jax.random.normal(ks[0], (N, C, H, W), dtype=jnp.float32),
               jax.random.normal(ks[1], (N, C, H, W), dtype=jnp.float32)]
    mask0 = jax.random.randint(ks[2], (H, W), 0, 256, dtype=jnp.int32)
    _check(res_f32, mask0)

    # 2) bf16 inputs pass straight through (kernel casts tiles to f32).
    _check([r.astype(jnp.bfloat16) for r in res_f32], mask0)

    # 3) Multi-tile + ragged last tile + streamed uint8 mask + halo carry.
    #    H=320, W=16 -> folded (40, 128); tile_h=32 -> 2 tiles, last has 8 rows.
    H3, W3 = 320, 16
    res3 = [jax.random.normal(ks[3], (1, 3, H3, W3), dtype=jnp.float32)]
    mask3 = jax.random.randint(ks[4], (H3, W3), 0, 256, dtype=jnp.int32)
    _check(res3, mask3, tile_h=32, mask_resident=False)

    # 4) No fold (W=128), multi-tile, VMEM-resident mask + in-kernel slice.
    H4, W4 = 128, 128
    res4 = [jax.random.normal(ks[5], (1, 1, H4, W4), dtype=jnp.float32)]
    mask4 = jax.random.randint(ks[2], (H4, W4), 0, 256, dtype=jnp.int32)
    _check(res4, mask4, tile_h=32)

    print("KERNEL_OK")
</pallas_src>

<mosaic_0001>
module attributes {stable_mosaic.version = 11 : i64} {
  func.func @kernel(%arg0: i32, %arg1: i32, %arg2: memref<1x2x128xf32, #tpu.memory_space<vmem>>, %arg3: memref<2x128xi8, #tpu.memory_space<vmem>>, %arg4: memref<1x2x128xf32, #tpu.memory_space<vmem>>, %arg5: memref<1x128xf32, #tpu.memory_space<vmem>>) attributes {dimension_semantics = [#tpu.dimension_semantics<parallel>, #tpu.dimension_semantics<arbitrary>], iteration_bounds = array<i64: 6, 1>, scalar_prefetch = 0 : i64, scratch_operands = 1 : i64, tpu.core_type = #tpu.core_type<tc>, window_params = [{transform_indices = @transform_0, window_bounds = array<i64: 1, 2, 128>}, {transform_indices = @transform_1, window_bounds = array<i64: 2, 128>}, {transform_indices = @transform_2, window_bounds = array<i64: 1, 2, 128>}]} {
    %c0 = arith.constant 0 : index
    %c0_0 = arith.constant 0 : index
    %c0_1 = arith.constant 0 : index
    %0 = vector.load %arg2[%c0, %c0_0, %c0_1] : memref<1x2x128xf32, #tpu.memory_space<vmem>>, vector<1x2x128xf32>
    %1 = vector.shape_cast %0 : vector<1x2x128xf32> to vector<2x128xf32>
    %c0_i32 = arith.constant 0 : i32
    %2 = arith.cmpi eq, %arg1, %c0_i32 : i32
    %3 = arith.extui %2 : i1 to i32
    %c0_i32_2 = arith.constant 0 : i32
    %4 = arith.cmpi ne, %3, %c0_i32_2 : i32
    scf.if %4 {
      %cst_28 = arith.constant 0.000000e+00 : f32
      %58 = vector.broadcast %cst_28 : f32 to vector<2x128xf32>
      %c0_29 = arith.constant 0 : index
      %c0_30 = arith.constant 0 : index
      %c0_31 = arith.constant 0 : index
      %59 = vector.load %arg4[%c0_29, %c0_30, %c0_31] : memref<1x2x128xf32, #tpu.memory_space<vmem>>, vector<1x2x128xf32>
      %60 = vector.shape_cast %59 : vector<1x2x128xf32> to vector<2x128xf32>
      %61 = vector.shape_cast %58 : vector<2x128xf32> to vector<1x2x128xf32>
      tpu.vector_store %arg4[%c0_29, %c0_30, %c0_31], %61 {strides = array<i32>} : memref<1x2x128xf32, #tpu.memory_space<vmem>>, vector<1x2x128xf32>,
      %cst_32 = arith.constant 0.000000e+00 : f32
      %62 = vector.broadcast %cst_32 : f32 to vector<1x128xf32>
      %c0_33 = arith.constant 0 : index
      %c0_34 = arith.constant 0 : index
      %63 = vector.load %arg5[%c0_33, %c0_34] : memref<1x128xf32, #tpu.memory_space<vmem>>, vector<1x128xf32>
      tpu.vector_store %arg5[%c0_33, %c0_34], %62 {strides = array<i32>} : memref<1x128xf32, #tpu.memory_space<vmem>>, vector<1x128xf32>,
    } else {
    }
    %5 = tpu.iota {dimensions = array<i32: 0>} : vector<2x128xi32>
    %6 = tpu.iota {dimensions = array<i32: 1>} : vector<2x128xi32>
    %c0_3 = arith.constant 0 : index
    %c0_4 = arith.constant 0 : index
    %7 = vector.load %arg5[%c0_3, %c0_4] : memref<1x128xf32, #tpu.memory_space<vmem>>, vector<1x128xf32>
    %c0_i32_5 = arith.constant 0 : i32
    %8 = vector.broadcast %c0_i32_5 : i32 to vector<2x128xi32>
    %9 = arith.cmpi eq, %5, %8 : vector<2x128xi32>
    %c1_i32 = arith.constant 1 : i32
    %10 = tpu.dynamic_rotate %1 by %c1_i32 dim 0 : vector<2x128xf32>, i32 -> vector<2x128xf32>
    %11 = vector.shape_cast %7 : vector<1x128xf32> to vector<1x128xf32>
    %12 = vector.broadcast %11 : vector<1x128xf32> to vector<2x128xf32>
    %13 = arith.select %9, %12, %10 : vector<2x128xi1>, vector<2x128xf32>
    %c16_i32 = arith.constant 16 : i32
    %14 = vector.broadcast %c16_i32 : i32 to vector<2x128xi32>
    %15 = arith.cmpi slt, %6, %14 : vector<2x128xi32>
    %c16_i32_6 = arith.constant 16 : i32
    %16 = tpu.dynamic_rotate %13 by %c16_i32_6 dim 1 : vector<2x128xf32>, i32 -> vector<2x128xf32>
    %c16_i32_7 = arith.constant 16 : i32
    %17 = tpu.dynamic_rotate %1 by %c16_i32_7 dim 1 : vector<2x128xf32>, i32 -> vector<2x128xf32>
    %18 = arith.select %15, %16, %17 : vector<2x128xi1>, vector<2x128xf32>
    %c16_i32_8 = arith.constant 16 : i32
    %c0_i32_9 = arith.constant 0 : i32
    %19 = arith.cmpi eq, %c16_i32_8, %c0_i32_9 : i32
    %c1_i32_10 = arith.constant 1 : i32
    %20 = arith.select %19, %c1_i32_10, %c16_i32_8 : i32
    %21 = vector.broadcast %20 : i32 to vector<2x128xi32>
    %22 = arith.remsi %6, %21 : vector<2x128xi32>
    %c0_i32_11 = arith.constant 0 : i32
    %23 = vector.broadcast %c0_i32_11 : i32 to vector<2x128xi32>
    %24 = arith.cmpi ne, %22, %23 : vector<2x128xi32>
    %c0_i32_12 = arith.constant 0 : i32
    %25 = vector.broadcast %c0_i32_12 : i32 to vector<2x128xi32>
    %26 = arith.cmpi slt, %22, %25 : vector<2x128xi32>
    %c0_i32_13 = arith.constant 0 : i32
    %27 = arith.cmpi slt, %20, %c0_i32_13 : i32
    %28 = vector.broadcast %27 : i1 to vector<2x128xi1>
    %29 = vector.broadcast %28 : vector<2x128xi1> to vector<2x128xi1>
    %30 = arith.xori %26, %29 : vector<2x128xi1>
    %31 = arith.andi %30, %24 : vector<2x128xi1>
    %32 = vector.broadcast %20 : i32 to vector<2x128xi32>
    %33 = arith.addi %22, %32 : vector<2x128xi32>
    %34 = arith.select %31, %33, %22 : vector<2x128xi1>, vector<2x128xi32>
    %c0_i32_14 = arith.constant 0 : i32
    %35 = vector.broadcast %c0_i32_14 : i32 to vector<2x128xi32>
    %36 = arith.cmpi eq, %34, %35 : vector<2x128xi32>
    %c1_i32_15 = arith.constant 1 : i32
    %37 = tpu.dynamic_rotate %1 by %c1_i32_15 dim 1 : vector<2x128xf32>, i32 -> vector<2x128xf32>
    %cst = arith.constant 0.000000e+00 : f32
    %38 = vector.broadcast %cst : f32 to vector<2x128xf32>
    %39 = arith.select %36, %38, %37 : vector<2x128xi1>, vector<2x128xf32>
    %40 = arith.addf %18, %39 : vector<2x128xf32>
    %cst_16 = arith.constant 2.000000e+00 : f32
    %41 = vector.broadcast %cst_16 : f32 to vector<2x128xf32>
    %42 = arith.mulf %41, %1 : vector<2x128xf32>
    %43 = arith.subf %40, %42 : vector<2x128xf32>
    %44 = math.absf %43 : vector<2x128xf32>
    %c0_17 = arith.constant 0 : index
    %c0_18 = arith.constant 0 : index
    %45 = vector.load %arg3[%c0_17, %c0_18] : memref<2x128xi8, #tpu.memory_space<vmem>>, vector<2x128xi8>
    %c0_i8 = arith.constant 0 : i8
    %46 = vector.broadcast %c0_i8 : i8 to vector<2x128xi8>
    %47 = arith.cmpi ne, %45, %46 : vector<2x128xi8>
    %cst_19 = arith.constant 0.000000e+00 : f32
    %48 = vector.broadcast %cst_19 : f32 to vector<2x128xf32>
    %49 = arith.select %47, %44, %48 : vector<2x128xi1>, vector<2x128xf32>
    %c0_20 = arith.constant 0 : index
    %c0_21 = arith.constant 0 : index
    %c0_22 = arith.constant 0 : index
    %50 = vector.load %arg4[%c0_20, %c0_21, %c0_22] : memref<1x2x128xf32, #tpu.memory_space<vmem>>, vector<1x2x128xf32>
    %51 = vector.shape_cast %50 : vector<1x2x128xf32> to vector<2x128xf32>
    %52 = arith.addf %51, %49 : vector<2x128xf32>
    %c0_23 = arith.constant 0 : index
    %c0_24 = arith.constant 0 : index
    %c0_25 = arith.constant 0 : index
    %53 = vector.load %arg4[%c0_23, %c0_24, %c0_25] : memref<1x2x128xf32, #tpu.memory_space<vmem>>, vector<1x2x128xf32>
    %54 = vector.shape_cast %53 : vector<1x2x128xf32> to vector<2x128xf32>
    %55 = vector.shape_cast %52 : vector<2x128xf32> to vector<1x2x128xf32>
    tpu.vector_store %arg4[%c0_23, %c0_24, %c0_25], %55 {strides = array<i32>} : memref<1x2x128xf32, #tpu.memory_space<vmem>>, vector<1x2x128xf32>,
    %56 = vector.extract_strided_slice %1 {offsets = [1, 0], sizes = [1, 128], strides = [1, 1]} : vector<2x128xf32> to vector<1x128xf32>
    %c0_26 = arith.constant 0 : index
    %c0_27 = arith.constant 0 : index
    %57 = vector.load %arg5[%c0_26, %c0_27] : memref<1x128xf32, #tpu.memory_space<vmem>>, vector<1x128xf32>
    tpu.vector_store %arg5[%c0_26, %c0_27], %56 {strides = array<i32>} : memref<1x128xf32, #tpu.memory_space<vmem>>, vector<1x128xf32>,
    return
  }
  func.func @transform_0(%arg0: i32, %arg1: i32) -> (i32, i32, i32) {
    %c0_i32 = arith.constant 0 : i32
    %c0_i32_0 = arith.constant 0 : i32
    return %arg0, %arg1, %c0_i32 : i32, i32, i32
  }
  func.func @transform_1(%arg0: i32, %arg1: i32) -> (i32, i32) {
    %c0_i32 = arith.constant 0 : i32
    %c0_i32_0 = arith.constant 0 : i32
    return %arg1, %c0_i32 : i32, i32
  }
  func.func @transform_2(%arg0: i32, %arg1: i32) -> (i32, i32, i32) {
    %c0_i32 = arith.constant 0 : i32
    %c0_i32_0 = arith.constant 0 : i32
    %c0_i32_1 = arith.constant 0 : i32
    return %arg0, %c0_i32, %c0_i32_0 : i32, i32, i32
  }
}

</mosaic_0001>

<llo_original>
// kernel: tpu_custom_call.1
$region0: #{tpu_custom_call.1}
  #allocation0 [shape = 'u32[]', space=smem, size = 0x4, offset = 0x4, fixed_abs, tag = 'smem constant byte address 0x4 - core index']
  #allocation1 [shape = 'u32[144,128]{1,0:T(1,128)}', space=vmem, size = 0x12000, scoped, tag = 'internal scratch']
  #allocation2 [shape = 'f32[1,128]{1,0:T(1,128)}', space=vmem, size = 0x200, scoped, tag = 'scratch operand']
  %s0 = inlined_call_operand.hbm [shape: f32[6,2,128], index: 0, kind: input, shape index: {}]
  %s1 = inlined_call_operand.vmem [shape: u8[2,128], index: 1, kind: input, shape index: {}]
  %s2 = inlined_call_operand.hbm [shape: f32[6,2,128], index: 2, kind: output, shape index: {}]
  %s3 = sld [smem:[#allocation0]]
  $region49: #{tpu_custom_call.1} parent=0
    _
  %s5 = ssub.s32 1, %s3
  %s6 = scalar_select 0, %s5, %s3
  $region1: #{tpu_custom_call.1} parent=0
    #allocation3 [shape = 'u8[2048]{0}', space=vmem, size = 0x800, scoped, tag = 'input window, operand 0']
    #allocation4 [shape = 's32[2]{0}', space=sflag, size = 0x8, scoped, tag = 'scoped memory for tpu_custom_call.1']
    #allocation5 [shape = 's32[2]{0}', space=sflag, size = 0x8, scoped, tag = 'scoped memory for tpu_custom_call.1']
    #allocation6 [shape = 'u8[2048]{0}', space=vmem, size = 0x800, scoped, tag = 'output window, operand 0']
    %7 = vsyncpa [#allocation4], 0
    %s8 = scalar_lea.sflag [#allocation4], 1
    %9 = vsyncpa %s8, 0
    %10 = vsyncpa [#allocation5], 0
    %s11 = scalar_lea.sflag [#allocation5], 1
    %12 = vsyncpa %s11, 0
    loop: start=0, step=1, limit=8
    $region2: #{tpu_custom_call.1} parent=1 // loop_pre_header
      _
    $region3: #{tpu_custom_call.1} parent=1 // loop_header
      %s14 = sphi 0, %s18
      %p15 = scmp.ge.s32.totalorder %s14, 8
      %s21 = sphi 0, %s33
      %s22 = sphi 0, %s29
      %s23 = sphi 0, %s21
      %s24 = sphi 0, %s22
      %s25 = sphi 0, %s23
      %s26 = sphi 0, %s24
      %s38 = sphi 0, %s40
      %s41 = sphi 0, %s38
      %s42 = sphi 0, %s41
      %s58 = sphi 0, %s42
      %s64 = sphi 0, %s66
      %s67 = sphi 0, %s64
      %s68 = sphi 0, %s67
      %s84 = sphi 0, %s68
      %s90 = sphi 0, %s92
      %s93 = sphi 0, %s90
      %s94 = sphi 0, %s93
      %s110 = sphi 0, %s94
    $region4: #{tpu_custom_call.1} parent=1 // loop_header_branch
      %17 = sbr.rel (%p15) target = $region8
    $region5: #{tpu_custom_call.1} parent=1 // loop_body
      %s19 = ssub.s32 %s14, 1
      %s20 = ssub.s32 %s14, 2
      %s27 = sadd.s32 1, %s22
      %p28 = scmp.ge.s32.totalorder %s27, 1
      %s29 = scalar_select %p28, 0, %s27
      %s30 = sadd.s32 1, %s21
      %s31 = scalar_select %p28, %s30, %s21
      %p32 = scmp.ge.s32.totalorder %s31, 6
      %s33 = scalar_select %p32, 0, %s31
      %s34 = ssub.s32 %s21, %s33
      %s35 = ssub.s32 %s22, %s29
      %s36 = sor.u32 %s34, %s35
      %p37 = scmp.eq.s32.totalorder %s36, 0
      %s39 = sadd.s32 %s38, 1
      %s40 = scalar_select %p37, %s38, %s39
      %p43 = pneg %p37
      %p44 = scmp.eq.s32.totalorder %s14, 5
      %p45 = por %p43, %p44
      %p46 = scmp.ne.s32.totalorder %s38, %s41
      %p47 = scmp.eq.s32.totalorder %s14, 0
      %p48 = por %p46, %p47
      %p49 = scmp.ne.s32.totalorder %s38, %s41
      %p50 = scmp.eq.s32.totalorder %s19, 5
      %p51 = por %p49, %p50
      %p52 = scmp.ne.s32.totalorder %s41, %s42
      %p53 = scmp.eq.s32.totalorder %s19, 0
      %p54 = por %p52, %p53
      %p55 = scmp.ne.s32.totalorder %s41, %s42
      %p56 = scmp.eq.s32.totalorder %s20, 5
      %p57 = por %p55, %p56
      %p59 = scmp.ne.s32.totalorder %s42, %s58
      %p60 = scmp.eq.s32.totalorder %s20, 0
      %p61 = por %p59, %p60
      %s62 = ssub.s32 %s22, %s29
      %p63 = scmp.eq.s32.totalorder %s62, 0
      %s65 = sadd.s32 %s64, 1
      %s66 = scalar_select %p63, %s64, %s65
      %p69 = pneg %p63
      %p70 = scmp.eq.s32.totalorder %s14, 5
      %p71 = por %p69, %p70
      %p72 = scmp.ne.s32.totalorder %s64, %s67
      %p73 = scmp.eq.s32.totalorder %s14, 0
      %p74 = por %p72, %p73
      %p75 = scmp.ne.s32.totalorder %s64, %s67
      %p76 = scmp.eq.s32.totalorder %s19, 5
      %p77 = por %p75, %p76
      %p78 = scmp.ne.s32.totalorder %s67, %s68
      %p79 = scmp.eq.s32.totalorder %s19, 0
      %p80 = por %p78, %p79
      %p81 = scmp.ne.s32.totalorder %s67, %s68
      %p82 = scmp.eq.s32.totalorder %s20, 5
      %p83 = por %p81, %p82
      %p85 = scmp.ne.s32.totalorder %s68, %s84
      %p86 = scmp.eq.s32.totalorder %s20, 0
      %p87 = por %p85, %p86
      %s88 = ssub.s32 %s21, %s33
      %p89 = scmp.eq.s32.totalorder %s88, 0
      %s91 = sadd.s32 %s90, 1
      %s92 = scalar_select %p89, %s90, %s91
      %p95 = pneg %p89
      %p96 = scmp.eq.s32.totalorder %s14, 5
      %p97 = por %p95, %p96
      %p98 = scmp.ne.s32.totalorder %s90, %s93
      %p99 = scmp.eq.s32.totalorder %s14, 0
      %p100 = por %p98, %p99
      %p101 = scmp.ne.s32.totalorder %s90, %s93
      %p102 = scmp.eq.s32.totalorder %s19, 5
      %p103 = por %p101, %p102
      %p104 = scmp.ne.s32.totalorder %s93, %s94
      %p105 = scmp.eq.s32.totalorder %s19, 0
      %p106 = por %p104, %p105
      %p107 = scmp.ne.s32.totalorder %s93, %s94
      %p108 = scmp.eq.s32.totalorder %s20, 5
      %p109 = por %p107, %p108
      %p111 = scmp.ne.s32.totalorder %s94, %s110
      %p112 = scmp.eq.s32.totalorder %s20, 0
      %p113 = por %p111, %p112
      %p114 = scmp.le.s32.totalorder 1, %s14
      %p115 = scmp.lt.s32.totalorder %s14, 7
      %p116 = pnand %p114, %p115
      %p117 = pneg %p116
      // Predicated region
      $region9: #{tpu_custom_call.1} parent=5 // pred_check
        _
      $region10: #{tpu_custom_call.1} parent=5 // pred_check_branch
        %119 = sbr.rel (%p116) target = $region12
      $region11: #{tpu_custom_call.1} parent=5 // pred_region
        %s120 = ssub.s32 %s14, 1
        // Predicated region
        $region13: #{tpu_custom_call.1} parent=11 // pred_check
          %p121 = pneg %p80
        $region14: #{tpu_custom_call.1} parent=11 // pred_check_branch
          %123 = sbr.rel (%p121) target = $region16
        $region15: #{tpu_custom_call.1} parent=11 // pred_region
          %p124 = scmp.lt.s32.totalorder %s24, 0
          %s125 = scalar_select %p124, %s24, 0
          %s126 = scalar_lea.vmem %s1, %s125
        $region16: #{tpu_custom_call.1} parent=11 // pred_fallthru
          _
      $region12: #{tpu_custom_call.1} parent=5 // pred_fallthru
        _
      %p127 = scmp.lt.s32.totalorder %s14, 6
      // Predicated region
      $region17: #{tpu_custom_call.1} parent=5 // pred_check
        %p128 = pneg %p127
      $region18: #{tpu_custom_call.1} parent=5 // pred_check_branch
        %130 = sbr.rel (%p128) target = $region20
      $region19: #{tpu_custom_call.1} parent=5 // pred_region
        // Predicated region
        $region21: #{tpu_custom_call.1} parent=19 // pred_check
          %p131 = pneg %p48
        $region22: #{tpu_custom_call.1} parent=19 // pred_check_branch
          %133 = sbr.rel (%p131) target = $region24
        $region23: #{tpu_custom_call.1} parent=19 // pred_region
          %s134 = sand.u32 %s38, 1
          %s135 = scalar_lea.sflag [#allocation4], %s134
          %s136 = sand.u32 %s38, 1
          %s137 = smul.addr %s136, 2
          %s138 = scalar_lea.vmem [#allocation3], %s137
          %s140 = ssub.s32 32, 32
          %141 = vsyncadd %s135, %s140
          %s142 = sadd.s32 %s22, %s21
          %s143 = smul.addr %s142, 32
          %s144 = scalar_lea.hbm %s0, %s143
          %s146 = sshll.u32 %s138, 4
          %s147 = int_to_ptr.vmem [resolvable:$true] %s146
          %149 = dma.hbm_to_vmem [thread:$0]  %s144, 32, %s147, %s135
        $region24: #{tpu_custom_call.1} parent=19 // pred_fallthru
          _
      $region20: #{tpu_custom_call.1} parent=5 // pred_fallthru
        _
      %p150 = scmp.le.s32.totalorder 1, %s14
      %p151 = scmp.lt.s32.totalorder %s14, 7
      %p152 = pnand %p150, %p151
      %p153 = pneg %p152
      // Predicated region
      $region25: #{tpu_custom_call.1} parent=5 // pred_check
        _
      $region26: #{tpu_custom_call.1} parent=5 // pred_check_branch
        %155 = sbr.rel (%p152) target = $region28
      $region27: #{tpu_custom_call.1} parent=5 // pred_region
        %s156 = ssub.s32 %s14, 1
        %s157 = sand.u32 %s41, 1
        %s158 = scalar_lea.sflag [#allocation4], %s157
        %s159 = sand.u32 %s41, 1
        %s160 = smul.addr %s159, 2
        %s161 = scalar_lea.vmem [#allocation3], %s160
        // Predicated region
        $region29: #{tpu_custom_call.1} parent=27 // pred_check
          %p162 = pneg %p54
        $region30: #{tpu_custom_call.1} parent=27 // pred_check_branch
          %164 = sbr.rel (%p162) target = $region32
        $region31: #{tpu_custom_call.1} parent=27 // pred_region
          %165 = dma.done %s158, 32
        $region32: #{tpu_custom_call.1} parent=27 // pred_fallthru
          _
        %s166 = sand.u32 %s41, 1
        %s167 = scalar_lea.sflag [#allocation4], %s166
        %s168 = sand.u32 %s41, 1
        %s169 = smul.addr %s168, 2
        %s170 = scalar_lea.vmem [#allocation3], %s169
        %p171 = pneg %p54
        %p172 = pneg %p51
        %p173 = scmp.lt.s32.totalorder %s24, 0
        %s174 = scalar_select %p173, %s24, 0
        %s175 = scalar_lea.vmem %s1, %s174
        %p176 = pneg %p80
        %p177 = pneg %p77
        %p178 = pneg %p106
        %p179 = pneg %p103
        %s180 = sand.u32 %s93, 1
        %s181 = scalar_lea.sflag [#allocation5], %s180
        %s182 = sand.u32 %s93, 1
        %s183 = smul.addr %s182, 2
        %s184 = scalar_lea.vmem [#allocation6], %s183
        %p185 = scmp.lt.s32.totalorder %s24, 0
        %s186 = scalar_select %p185, %s24, 0
        %s187 = scalar_lea.vmem %s1, %s186
        %v190 = vld [vmem:[%s161] sm:$0x3]
        %p191 = scmp.eq.s32.totalorder %s24, 0
        // Predicated region
        $region33: #{tpu_custom_call.1} parent=27 // pred_check
          %p192 = pneg %p191
        $region34: #{tpu_custom_call.1} parent=27 // pred_check_branch
          %194 = sbr.rel (%p192) target = $region36
        $region35: #{tpu_custom_call.1} parent=27 // pred_region
          %195 = vst [vmem:[%s184] sm:$0x3] 0.0
          %196 = vst [vmem:[#allocation2] sm:$0x1] 0.0
        $region36: #{tpu_custom_call.1} parent=27 // pred_fallthru
          _
        %v197 = vlaneseq
        %v198 = vshrl.u32 %v197, 7
        %v199 = vlaneseq
        %v200 = vand.u32 %v199, 127
        %v201 = vld [vmem:[#allocation2] sm:$0x1]
        %vm202 = vcmp.eq.s32.totalorder %v198, 0
        %vm203 = vcmask 1047554
        %v204 = vrot.slane %v190, 6
        %v205 = vsel %vm203, %v204, %v190
        %v206 = vrot.slane %v205, 6
        %v207 = vsel %vm203, %v206, %v190
        %v209 = vlaneseq
        %v210 = vshrl.u32 %v209, 7
        %v211 = vsub.s32 0, %v210
        %v212 = vrot.slane %v201, %v211
        %v215 = vrot.slane %v207, 1
        %v217 = vsel %vm202, %v212, %v215
        %vm218 = vcmp.lt.s32.totalorder %v200, 16
        %219 = vrot.lane.b32.xlu0 %v217, 16
        %v220 = vpop.permute.xlu0 %219
        %221 = vrot.lane.b32.xlu0 %v190, 16
        %v222 = vpop.permute.xlu0 %221
        %v223 = vsel %vm218, %v220, %v222
        %vm224 = vcmp.lt.s32.totalorder %v200, 0
        %v225 = vsub.s32 0, %v200
        %v226 = vsel %vm224, %v225, %v200
        %v227 = vshrl.u32 %v226, 4
        %v228 = vand.u32 %v226, 15
        %v229 = vsub.s32 0, %v228
        %v230 = vsel %vm224, %v229, %v228
        %vm231 = vcmp.ne.s32.totalorder %v230, 0
        %vm232 = vcmp.lt.s32.totalorder %v230, 0
        %vm233 = vmand %vm232, %vm231
        %v234 = vadd.s32 %v230, 16
        %v235 = vsel %vm233, %v234, %v230
        %vm236 = vcmp.eq.s32.totalorder %v235, 0
        %237 = vrot.lane.b32.xlu0 %v190, 1
        %v238 = vpop.permute.xlu0 %237
        %v239 = vsel %vm236, 0.0, %v238
        %v240 = vadd.f32 %v223, %v239
        %v241 = vmul.f32 %v190, 2.0
        %v242 = vsub.f32 %v240, %v241
        %v243 = vand.u32 2147483647, %v242
        %v244 = vld [vmem:[%s187] sm:$0x1]
        %vm245 = vnez %v244
        %v246 = vsel %vm245, 16843009, 0
        %v247 = vunpack.c.0.s8 %v246
        %vm248 = vcmp.ne.s32.totalorder %v247, 0
        %v249 = vsel %vm248, %v243, 0.0
        %v250 = vld [vmem:[%s184] sm:$0x3]
        %v251 = vadd.f32 %v250, %v249
        %252 = vst [vmem:[%s184] sm:$0x3] %v251
        %253 = vst [vmem:[#allocation2 - $0x1] sm:$0x2] %v190
        %s254 = sand.u32 %s93, 1
        %s255 = scalar_lea.sflag [#allocation5], %s254
        %s256 = sand.u32 %s93, 1
        %s257 = smul.addr %s256, 2
        %s258 = scalar_lea.vmem [#allocation6], %s257
        // Predicated region
        $region37: #{tpu_custom_call.1} parent=27 // pred_check
          %p259 = pneg %p103
        $region38: #{tpu_custom_call.1} parent=27 // pred_check_branch
          %261 = sbr.rel (%p259) target = $region40
        $region39: #{tpu_custom_call.1} parent=27 // pred_region
          %s263 = ssub.s32 32, 32
          %264 = vsyncadd %s255, %s263
          %s265 = smul.addr %s23, 32
          %s266 = scalar_lea.hbm %s2, %s265
          %s268 = sshll.u32 %s258, 4
          %s269 = int_to_ptr.vmem [resolvable:$true] %s268
          %271 = dma.vmem_to_hbm [thread:$0]  %s269, 32, %s266, %s255
        $region40: #{tpu_custom_call.1} parent=27 // pred_fallthru
          _
      $region28: #{tpu_custom_call.1} parent=5 // pred_fallthru
        _
      %p272 = scmp.le.s32.totalorder 2, %s14
      // Predicated region
      $region41: #{tpu_custom_call.1} parent=5 // pred_check
        %p273 = pneg %p272
      $region42: #{tpu_custom_call.1} parent=5 // pred_check_branch
        %275 = sbr.rel (%p273) target = $region44
      $region43: #{tpu_custom_call.1} parent=5 // pred_region
        %s276 = ssub.s32 %s14, 2
        // Predicated region
        $region45: #{tpu_custom_call.1} parent=43 // pred_check
          %p277 = pneg %p109
        $region46: #{tpu_custom_call.1} parent=43 // pred_check_branch
          %279 = sbr.rel (%p277) target = $region48
        $region47: #{tpu_custom_call.1} parent=43 // pred_region
          %s280 = sand.u32 %s94, 1
          %s281 = scalar_lea.sflag [#allocation5], %s280
          %s282 = sand.u32 %s94, 1
          %s283 = smul.addr %s282, 2
          %s284 = scalar_lea.vmem [#allocation6], %s283
          %285 = dma.done %s281, 32
        $region48: #{tpu_custom_call.1} parent=43 // pred_fallthru
          _
      $region44: #{tpu_custom_call.1} parent=5 // pred_fallthru
        _
    $region6: #{tpu_custom_call.1} parent=1 // loop_footer
      %s18 = sadd.s32 1, %s14
    $region7: #{tpu_custom_call.1} parent=1 // loop_footer_branch
      %13 = sbr.rel target = $region3
    $region8: #{tpu_custom_call.1} parent=1 // loop_exit
      _
    %286 = vsyncpa [#allocation4], 1
    %s287 = scalar_lea.sflag [#allocation4], 1
    %288 = vsyncpa %s287, 1
    %289 = vsyncpa [#allocation5], 1
    %s290 = scalar_lea.sflag [#allocation5], 1
    %291 = vsyncpa %s290, 1

</llo_original>
